<compile_context>
chip_gen: v7x
topology: tpu7x:2x2x1
jax: 0.10.0
libtpu: 0.0.40
codegen_flags: <defaults>
</compile_context>

<pallas_src>
import jax
import jax.numpy as jnp
from jax.experimental import pallas as pl
from jax.experimental.pallas import tpu as pltpu

LANE = 512      # lane-dense slab width (multiple of 128)
MAX_TR = 1024   # rows per tile -> 1024*512*4B = 2 MiB per input block (f32)


def _round_up(x: int, m: int) -> int:
    return (x + m - 1) // m * m


def _log_l1_partial_kernel(x_ref, y_ref, o_ref):
    """Per-tile partial sum of |log(y) - log(x)|.

    x_ref, y_ref : (TR, LANE) VMEM tiles of the padded, lane-dense slabs.
    o_ref        : (1, 1) SMEM partial sum for this grid step (independent
                   per step, so the grid axis can be parallel).
    """
    x = x_ref[...].astype(jnp.float32)
    y = y_ref[...].astype(jnp.float32)
    diff = jnp.abs(jnp.log(y) - jnp.log(x))
    tr, lane = diff.shape
    # Fold sublane-groups with cheap VPU adds, then one cross-lane/sublane
    # XLU reduce per (large) tile.
    folded = jnp.sum(diff.reshape(tr // 8, 8, lane), axis=0)   # (8, LANE)
    o_ref[0, 0] = jnp.sum(folded)


def log_stft_magnitude_loss(x_mag: jax.Array, y_mag: jax.Array) -> jax.Array:
    """Pallas implementation of LogSTFTMagnitudeLoss.forward.

    Args:
      x_mag: (B, frames, freq_bins) magnitude spectrogram of predicted signal.
      y_mag: (B, frames, freq_bins) magnitude spectrogram of ground truth.
    Returns:
      scalar float32 loss = mean(|log(y_mag) - log(x_mag)|)
    """
    assert x_mag.shape == y_mag.shape
    n = int(x_mag.size)

    # Flatten to a lane-dense slab; pad with 1.0 so log(1)-log(1)=0.
    x1 = x_mag.reshape(-1)
    y1 = y_mag.reshape(-1)

    rows_needed = pl.cdiv(n, LANE)
    tr = min(MAX_TR, _round_up(rows_needed, 8))
    padded_rows = _round_up(rows_needed, tr)
    padded_n = padded_rows * LANE
    if padded_n != n:
        pad = padded_n - n
        ones_x = jnp.ones((pad,), dtype=x1.dtype)
        x1 = jnp.concatenate([x1, ones_x])
        y1 = jnp.concatenate([y1, jnp.ones((pad,), dtype=y1.dtype)])

    x2d = x1.reshape(padded_rows, LANE)
    y2d = y1.reshape(padded_rows, LANE)

    num_tiles = padded_rows // tr
    itemsize = x_mag.dtype.itemsize

    partials = pl.pallas_call(
        _log_l1_partial_kernel,
        out_shape=jax.ShapeDtypeStruct((num_tiles, 1), jnp.float32),
        grid_spec=pltpu.PrefetchScalarGridSpec(
            num_scalar_prefetch=0,
            grid=(num_tiles,),
            in_specs=[
                pl.BlockSpec((tr, LANE), lambda i: (i, 0)),
                pl.BlockSpec((tr, LANE), lambda i: (i, 0)),
            ],
            out_specs=pl.BlockSpec(
                (1, 1), lambda i: (i, 0), memory_space=pltpu.SMEM
            ),
        ),
        compiler_params=pltpu.CompilerParams(
            dimension_semantics=("parallel",),     # independent tiles -> megacore on v7x
            vmem_limit_bytes=32 * 1024 * 1024,
        ),
        cost_estimate=pl.CostEstimate(
            flops=3 * padded_n,
            transcendentals=2 * padded_n,
            bytes_accessed=2 * padded_n * itemsize + num_tiles * 4,
        ),
    )(x2d, y2d)

    # Tiny final reduce in the wrapper; divide by the TRUE element count.
    total = jnp.sum(partials)
    return (total / jnp.float32(n)).astype(jnp.float32)


if __name__ == "__main__":
    key = jax.random.PRNGKey(0)
    kx, ky, kx2, ky2 = jax.random.split(key, 4)

    # Case 1: (B, #frames, #freq_bins), lane-aligned freq bins.
    B, FRAMES, FREQ = 2, 16, 128
    x_mag = jax.random.uniform(kx, (B, FRAMES, FREQ), jnp.float32,
                               minval=0.1, maxval=2.0)
    y_mag = jax.random.uniform(ky, (B, FRAMES, FREQ), jnp.float32,
                               minval=0.1, maxval=2.0)
    loss = jax.block_until_ready(log_stft_magnitude_loss(x_mag, y_mag))
    ref = jnp.mean(jnp.abs(jnp.log(y_mag) - jnp.log(x_mag)))
    assert jnp.allclose(loss, ref, rtol=1e-5, atol=1e-6), (loss, ref)

    # Case 2: realistic non-multiple-of-128 freq bins (exercises the padding path).
    B2, FRAMES2, FREQ2 = 2, 50, 257
    x2 = jax.random.uniform(kx2, (B2, FRAMES2, FREQ2), jnp.float32,
                            minval=0.1, maxval=2.0)
    y2 = jax.random.uniform(ky2, (B2, FRAMES2, FREQ2), jnp.float32,
                            minval=0.1, maxval=2.0)
    loss2 = jax.block_until_ready(log_stft_magnitude_loss(x2, y2))
    ref2 = jnp.mean(jnp.abs(jnp.log(y2) - jnp.log(x2)))
    assert jnp.allclose(loss2, ref2, rtol=1e-5, atol=1e-6), (loss2, ref2)

    # NOTE: like the PyTorch reference, zero magnitudes produce -inf/NaN from
    # log(); clamping is assumed to happen upstream in the STFT pipeline.
    print("KERNEL_OK")
</pallas_src>

<mosaic_0001>
module attributes {stable_mosaic.version = 11 : i64} {
  func.func @_log_l1_partial_kernel(%arg0: i32, %arg1: memref<8x512xf32, #tpu.memory_space<vmem>>, %arg2: memref<8x512xf32, #tpu.memory_space<vmem>>, %arg3: memref<1x1xf32, #tpu.memory_space<smem>>) attributes {dimension_semantics = [#tpu.dimension_semantics<parallel>], iteration_bounds = array<i64: 1>, scalar_prefetch = 0 : i64, scratch_operands = 0 : i64, tpu.core_type = #tpu.core_type<tc>, window_params = [{transform_indices = @transform_0, window_bounds = array<i64: 8, 512>}, {transform_indices = @transform_1, window_bounds = array<i64: 8, 512>}, {transform_indices = @transform_2, window_bounds = array<i64: 1, 1>}]} {
    %c0 = arith.constant 0 : index
    %c0_0 = arith.constant 0 : index
    %0 = vector.load %arg1[%c0, %c0_0] : memref<8x512xf32, #tpu.memory_space<vmem>>, vector<8x512xf32>
    %c0_1 = arith.constant 0 : index
    %c0_2 = arith.constant 0 : index
    %1 = vector.load %arg2[%c0_1, %c0_2] : memref<8x512xf32, #tpu.memory_space<vmem>>, vector<8x512xf32>
    %2 = math.log %1 : vector<8x512xf32>
    %3 = math.log %0 : vector<8x512xf32>
    %4 = arith.subf %2, %3 : vector<8x512xf32>
    %5 = math.absf %4 : vector<8x512xf32>
    %6 = vector.shape_cast %5 : vector<8x512xf32> to vector<1x8x512xf32>
    %cst = arith.constant dense<0.000000e+00> : vector<8x512xf32>
    %7 = vector.multi_reduction <add>, %6, %cst [0] : vector<1x8x512xf32> to vector<8x512xf32>
    %8 = vector.shape_cast %7 : vector<8x512xf32> to vector<1x8x512xf32>
    %cst_3 = arith.constant dense<0.000000e+00> : vector<1xf32>
    %9 = vector.multi_reduction <add>, %8, %cst_3 [1, 2] : vector<1x8x512xf32> to vector<1xf32>
    %10 = vector.shape_cast %9 : vector<1xf32> to vector<1x1x1xf32>
    %11 = vector.extract %10[0, 0, 0] : f32 from vector<1x1x1xf32>
    %c0_4 = arith.constant 0 : index
    %c0_5 = arith.constant 0 : index
    %12 = memref.load %arg3[%c0_4, %c0_5] : memref<1x1xf32, #tpu.memory_space<smem>>
    memref.store %11, %arg3[%c0_4, %c0_5] : memref<1x1xf32, #tpu.memory_space<smem>>
    return
  }
  func.func @transform_0(%arg0: i32) -> (i32, i32) {
    %c0_i32 = arith.constant 0 : i32
    %c0_i32_0 = arith.constant 0 : i32
    return %arg0, %c0_i32 : i32, i32
  }
  func.func @transform_1(%arg0: i32) -> (i32, i32) {
    %c0_i32 = arith.constant 0 : i32
    %c0_i32_0 = arith.constant 0 : i32
    return %arg0, %c0_i32 : i32, i32
  }
  func.func @transform_2(%arg0: i32) -> (i32, i32) {
    %c0_i32 = arith.constant 0 : i32
    %c0_i32_0 = arith.constant 0 : i32
    return %arg0, %c0_i32 : i32, i32
  }
}

</mosaic_0001>

<llo_original>
// kernel: tpu_custom_call.1
$region0: #{tpu_custom_call.1}
  #allocation0 [shape = 'u32[]', space=smem, size = 0x4, offset = 0x4, fixed_abs, tag = 'smem constant byte address 0x4 - core index']
  #allocation1 [shape = 'u32[144,128]{1,0:T(1,128)}', space=vmem, size = 0x12000, scoped, tag = 'internal scratch']
  %s0 = inlined_call_operand.hbm [shape: f32[8,512], index: 0, kind: input, shape index: {}]
  %s1 = inlined_call_operand.hbm [shape: f32[8,512], index: 1, kind: input, shape index: {}]
  %s2 = inlined_call_operand.hbm [shape: f32[1,1], index: 2, kind: output, shape index: {}]
  %s3 = sld [smem:[#allocation0]]
  $region26: #{tpu_custom_call.1} parent=0
    _
  %s5 = ssub.s32 1, %s3
  %s6 = scalar_select 0, %s5, %s3
  $region1: #{tpu_custom_call.1} parent=0
    #allocation2 [shape = 'u8[16384]{0}', space=vmem, size = 0x4000, scoped, tag = 'input window, operand 0, single buffered']
    #allocation3 [shape = 's32[1]{0}', space=sflag, size = 0x4, scoped, tag = 'scoped memory for tpu_custom_call.1']
    #allocation4 [shape = 's32[1]{0}', space=sflag, size = 0x4, scoped, tag = 'scoped memory for tpu_custom_call.1']
    #allocation5 [shape = 'u8[16384]{0}', space=vmem, size = 0x4000, scoped, tag = 'input window, operand 1, single buffered']
    #allocation6 [shape = 's32[1]{0}', space=sflag, size = 0x4, scoped, tag = 'scoped memory for tpu_custom_call.1']
    #allocation7 [shape = 'u8[512]{0}', space=smem, size = 0x200, scoped, tag = 'output window, operand 0, single buffered']
    %7 = vsyncpa [#allocation3], 0
    %8 = vsyncpa [#allocation6], 0
    %9 = vsyncpa [#allocation4], 0
    // Predicated region
    $region2: #{tpu_custom_call.1} parent=1 // pred_check
      _
    $region3: #{tpu_custom_call.1} parent=1 // pred_check_branch
      %11 = sbr.rel (0) target = $region5
    $region4: #{tpu_custom_call.1} parent=1 // pred_region
      %s13 = ssub.s32 512, 512
      %14 = vsyncadd [#allocation3], %s13
      %s16 = sshll.u32 [#allocation2], 4
      %s17 = int_to_ptr.vmem [resolvable:$true] %s16
      %19 = dma.hbm_to_vmem [thread:$0]  %s0, 512, %s17, [#allocation3]
    $region5: #{tpu_custom_call.1} parent=1 // pred_fallthru
      _
    // Predicated region
    $region6: #{tpu_custom_call.1} parent=1 // pred_check
      _
    $region7: #{tpu_custom_call.1} parent=1 // pred_check_branch
      %21 = sbr.rel (0) target = $region9
    $region8: #{tpu_custom_call.1} parent=1 // pred_region
      %s23 = ssub.s32 512, 512
      %24 = vsyncadd [#allocation6], %s23
      %s26 = sshll.u32 [#allocation5], 4
      %s27 = int_to_ptr.vmem [resolvable:$true] %s26
      %29 = dma.hbm_to_vmem [thread:$0]  %s1, 512, %s27, [#allocation6]
    $region9: #{tpu_custom_call.1} parent=1 // pred_fallthru
      _
    // Predicated region
    $region10: #{tpu_custom_call.1} parent=1 // pred_check
      _
    $region11: #{tpu_custom_call.1} parent=1 // pred_check_branch
      %31 = sbr.rel (0) target = $region13
    $region12: #{tpu_custom_call.1} parent=1 // pred_region
      %32 = dma.done [#allocation3], 512
    $region13: #{tpu_custom_call.1} parent=1 // pred_fallthru
      _
    // Predicated region
    $region14: #{tpu_custom_call.1} parent=1 // pred_check
      _
    $region15: #{tpu_custom_call.1} parent=1 // pred_check_branch
      %34 = sbr.rel (0) target = $region17
    $region16: #{tpu_custom_call.1} parent=1 // pred_region
      %35 = dma.done [#allocation6], 512
    $region17: #{tpu_custom_call.1} parent=1 // pred_fallthru
      _
    %v36 = vld [vmem:[#allocation2] sm:$0xff]
    %v37 = vld [vmem:[#allocation2 + $0x8] sm:$0xff]
    %v38 = vld [vmem:[#allocation2 + $0x10] sm:$0xff]
    %v39 = vld [vmem:[#allocation2 + $0x18] sm:$0xff]
    %v40 = vld [vmem:[#allocation5] sm:$0xff]
    %v41 = vld [vmem:[#allocation5 + $0x8] sm:$0xff]
    %v42 = vld [vmem:[#allocation5 + $0x10] sm:$0xff]
    %v43 = vld [vmem:[#allocation5 + $0x18] sm:$0xff]
    %v44 = vlog2.pop %v40
    %v45 = vmul.f32 %v44, 0.6931472
    %v46 = vlog2.pop %v41
    %v47 = vmul.f32 %v46, 0.6931472
    %v48 = vlog2.pop %v42
    %v49 = vmul.f32 %v48, 0.6931472
    %v50 = vlog2.pop %v43
    %v51 = vmul.f32 %v50, 0.6931472
    %v52 = vlog2.pop %v36
    %v53 = vmul.f32 %v52, 0.6931472
    %v54 = vlog2.pop %v37
    %v55 = vmul.f32 %v54, 0.6931472
    %v56 = vlog2.pop %v38
    %v57 = vmul.f32 %v56, 0.6931472
    %v58 = vlog2.pop %v39
    %v59 = vmul.f32 %v58, 0.6931472
    %v60 = vsub.f32 %v45, %v53
    %v61 = vsub.f32 %v47, %v55
    %v62 = vsub.f32 %v49, %v57
    %v63 = vsub.f32 %v51, %v59
    %v64 = vand.u32 2147483647, %v60
    %v65 = vand.u32 2147483647, %v61
    %v66 = vand.u32 2147483647, %v62
    %v67 = vand.u32 2147483647, %v63
    %v68 = vadd.f32 %v64, 0.0
    %v69 = vadd.f32 %v65, 0.0
    %v70 = vadd.f32 %v66, 0.0
    %v71 = vadd.f32 %v67, 0.0
    %v72 = vadd.f32 %v68, %v69
    %v73 = vadd.f32 %v72, %v70
    %v74 = vadd.f32 %v73, %v71
    %75 = vadd.xlane.f32.xlu0 %v74
    %v76 = vpop.xlane.xlu0 %75
    %v77 = vrot.slane %v76, 4
    %v78 = vadd.f32 %v76, %v77
    %v79 = vrot.slane %v78, 2
    %v80 = vadd.f32 %v78, %v79
    %v81 = vrot.slane %v80, 1
    %v82 = vadd.f32 %v80, %v81
    %s83 = vtos %v82
    %s84 = scalar_lea.smem [#allocation7], 0
    %85 = sst [smem:[%s84]] %s83
    // Predicated region
    $region18: #{tpu_custom_call.1} parent=1 // pred_check
      _
    $region19: #{tpu_custom_call.1} parent=1 // pred_check_branch
      %87 = sbr.rel (0) target = $region21
    $region20: #{tpu_custom_call.1} parent=1 // pred_region
      %s89 = ssub.s32 16, 16
      %90 = vsyncadd [#allocation4], %s89
      %93 = dma.smem_to_hbm [#allocation7], 16, %s2, [#allocation4]
    $region21: #{tpu_custom_call.1} parent=1 // pred_fallthru
      _
    // Predicated region
    $region22: #{tpu_custom_call.1} parent=1 // pred_check
      _
    $region23: #{tpu_custom_call.1} parent=1 // pred_check_branch
      %95 = sbr.rel (0) target = $region25
    $region24: #{tpu_custom_call.1} parent=1 // pred_region
      %96 = dma.done [#allocation4], 16
    $region25: #{tpu_custom_call.1} parent=1 // pred_fallthru
      _
    %97 = sfence
    %98 = vsyncpa [#allocation3], 1
    %99 = vsyncpa [#allocation6], 1
    %100 = vsyncpa [#allocation4], 1

</llo_original>
